<compile_context>
chip_gen: v7x
topology: tpu7x:2x2x1
jax: 0.10.0
libtpu: 0.0.40
codegen_flags: <defaults>
</compile_context>

<pallas_src>
import functools

import jax
import jax.numpy as jnp
from jax import lax
from jax.experimental import pallas as pl
from jax.experimental.pallas import tpu as pltpu


def _exchange_kernel(channels,
                     feat_ref, sel_ref, labels_ref, mask_ref, cache_ref,
                     exch_ref, cache_out_ref):
    """One F-tile of the local exchange.

    feat_ref  : [B, TF]  flattened feature tile (native dtype)
    sel_ref   : [B, TF]  anchor rows already gathered by argmax(labels) (native dtype)
    labels_ref: [B, N]   labels, constant block (features.dtype; exact for 0/1)
    mask_ref  : [B, A]   0/1 exchange mask per (batch, attention-row), constant block
    cache_ref : [N, TF]  running cache tile (f32, aliased with cache_out)
    outputs   : exch [B, TF], cache_out [N, TF]
    """
    i = pl.program_id(0)
    tf = feat_ref.shape[-1]
    a_sz = mask_ref.shape[-1]

    feats = feat_ref[...]                           # [B, TF] native dtype
    labels = labels_ref[...]                        # [B, N]  native dtype

    # ---- cache[:, tile] += labels^T @ feats  (MXU, K = B, f32 accumulate) ----
    batch_cache = lax.dot_general(
        labels, feats,
        dimension_numbers=(((0,), (0,)), ((), ())),
        preferred_element_type=jnp.float32)         # [N, TF]
    cache_out_ref[...] = cache_ref[...] + batch_cache

    # ---- expand per-(b, a) 0/1 mask to per-lane [B, TF] with an iota-built [A, TF]
    # expansion; lane j of tile i belongs to attention row (i*TF + j) // channels.
    # Costs zero HBM bytes; the compares/dot are hidden under the DMA streams. ----
    col = lax.broadcasted_iota(jnp.int32, (a_sz, tf), 1)
    row = lax.broadcasted_iota(jnp.int32, (a_sz, tf), 0)
    g = i * tf + col                                # absolute flattened-F lane index
    lo = row * channels
    expand = ((g >= lo) & (g < lo + channels)).astype(jnp.float32)      # [A, TF]
    mask_exp = jnp.dot(mask_ref[...], expand,
                       preferred_element_type=jnp.float32)              # [B, TF] 0/1

    # ---- stochastic local exchange: single compare + select on the VPU ----
    exch_ref[...] = jnp.where(mask_exp > 0.5, sel_ref[...], feats).astype(exch_ref.dtype)


def _vmem_capacity_bytes():
    try:
        info = pltpu.get_tpu_info()
        return int(getattr(info, "vmem_capacity_bytes", 64 * 1024 * 1024))
    except Exception:
        return 64 * 1024 * 1024  # v7x-safe default


def _pick_tile_lanes(F, B, N, dsz, vmem_cap, max_tile_lanes=None):
    """Largest lane-dense TF that fits the double-buffered VMEM budget; prefer TF | F."""
    # Per F-lane, double-buffered: feats + sel + exch in native dtype, cache in/out f32.
    per_lane_db = 2 * (3 * B * dsz + 2 * N * 4)
    budget = int(vmem_cap * 0.6)                       # headroom for constants/scratch
    tf_cap = max(128, (budget // per_lane_db) // 128 * 128)
    if max_tile_lanes is not None:
        tf_cap = min(tf_cap, max(128, (int(max_tile_lanes) // 128) * 128))
    if F <= tf_cap:
        return F
    t = tf_cap
    while t >= 128:                                    # prefer no padded tail
        if F % t == 0:
            return t
        t -= 128
    return tf_cap


def exchnet_local_exchange(features, labels, anchor, cache, count, rand_u,
                           *, p=0.5, training=True, run_count=0, min_count=50,
                           max_tile_lanes=None):
    """JAX/Pallas equivalent of ExchNetLocalExchange.forward.

    Returns (exchanged_features, new_cache, new_count, new_run_count).
    Buffer updates are returned functionally instead of mutated in place.
    NOTE: `training` / `run_count` gating is host-side Python control flow (static
    values, matching the original .item() call in PyTorch).
    """
    # TODO(synk): torch.rand / run_count buffer statefulness is handled functionally in
    # this wrapper (rand_u passed in, run_count returned) rather than inside the kernel.
    if training:
        run_count = run_count + 1
    if not (training and run_count >= min_count):
        # eval path (or warm-up): identity on features, buffers untouched.
        return features, cache, count, run_count

    B, A, C = features.shape
    N = labels.shape[1]
    F = A * C
    dsz = jnp.dtype(features.dtype).itemsize

    # Streamed operands kept in native dtype (no wrapper-side upcasts of big arrays).
    feats2 = features.reshape(B, F)
    cache2 = cache.reshape(N, F).astype(jnp.float32)

    # ---- F-invariant pieces hoisted out of the kernel (tiny [B, N]-sized ops) ----
    cls_idx = jnp.argmax(labels, axis=1)
    sel2 = anchor.reshape(N, F)[cls_idx].astype(features.dtype)     # [B, F] gathered rows
    labels_k = labels.astype(features.dtype)                        # exact for 0/1 labels
    mask01 = (rand_u > p).astype(jnp.float32)                       # [B, A]
    new_count = (count.astype(jnp.float32)
                 + jnp.sum(labels.astype(jnp.float32), axis=0))     # wrapper-side count

    # ---- chip-aware lane-dense tile + consistent VMEM limit ----
    vmem_cap = _vmem_capacity_bytes()
    TF = _pick_tile_lanes(F, B, N, dsz, vmem_cap, max_tile_lanes)
    grid = (pl.cdiv(F, TF),)

    per_lane_db = 2 * (3 * B * dsz + 2 * N * 4)
    const_bytes = 2 * (B * N * dsz + B * A * 4)
    vmem_need = TF * per_lane_db + const_bytes
    vmem_limit = int(min(max(int(vmem_need * 1.5) + (2 << 20), 16 << 20),
                         int(vmem_cap * 0.9)))

    cost = pl.CostEstimate(
        flops=int(2 * B * N * F + 2 * B * A * F + 4 * B * F + N * F),
        transcendentals=0,
        bytes_accessed=int(dsz * (3 * B * F + B * N) + 4 * (2 * N * F + B * A)),
    )

    kern = functools.partial(_exchange_kernel, int(C))

    exch2, new_cache2 = pl.pallas_call(
        kern,
        out_shape=(
            jax.ShapeDtypeStruct((B, F), features.dtype),
            jax.ShapeDtypeStruct((N, F), jnp.float32),
        ),
        grid=grid,
        in_specs=[
            pl.BlockSpec((B, TF), lambda i: (0, i)),   # feats
            pl.BlockSpec((B, TF), lambda i: (0, i)),   # gathered anchor rows
            pl.BlockSpec((B, N), lambda i: (0, 0)),    # labels (constant block)
            pl.BlockSpec((B, A), lambda i: (0, 0)),    # 0/1 mask, NOT C-replicated
            pl.BlockSpec((N, TF), lambda i: (0, i)),   # cache (aliased to output 1)
        ],
        out_specs=(
            pl.BlockSpec((B, TF), lambda i: (0, i)),   # exchanged features
            pl.BlockSpec((N, TF), lambda i: (0, i)),   # new cache
        ),
        input_output_aliases={4: 1},                   # cache accumulates in place
        compiler_params=pltpu.CompilerParams(
            dimension_semantics=("parallel",),         # F tiles are independent -> megacore
            vmem_limit_bytes=vmem_limit),
        cost_estimate=cost,
    )(feats2, sel2, labels_k, mask01, cache2)

    exch = exch2.reshape(B, A, C)
    new_cache = new_cache2.reshape(N, A, C)
    return exch, new_cache, new_count, run_count


if __name__ == "__main__":
    key = jax.random.PRNGKey(0)
    B, A, C, N = 4, 8, 128, 4          # batch, attention_size, channels, nclass (F = 1024)
    k1, k2, k3 = jax.random.split(key, 3)

    features = jax.random.normal(k1, (B, A, C), dtype=jnp.float32)
    label_idx = jnp.array([0, 1, 2, 1], dtype=jnp.int32)
    labels = jax.nn.one_hot(label_idx, N, dtype=jnp.float32)

    # Buffers: __init__ creates zeros; anchor is filled deterministically here as if
    # update_anchor() had already run so the exchange path is non-trivial.
    anchor = jax.random.normal(k2, (N, A, C), dtype=jnp.float32)
    cache = jnp.zeros((N, A, C), jnp.float32)
    count = jnp.zeros((N,), jnp.float32)

    # torch.rand(features.size(0), features.size(1)) equivalent (deterministic here).
    rand_u = jax.random.uniform(k3, (B, A), dtype=jnp.float32)
    p = 0.5

    # Pure-JAX reference of the PyTorch forward (training, run_count >= min_count).
    # Computed BEFORE the kernel since the cache input is aliased into the kernel output.
    batch_cache_ref = jnp.einsum('bac,bn->nac', features, labels)
    cache_expect = cache + batch_cache_ref
    count_expect = count + labels.sum(0)
    mask_expect = (rand_u > p).astype(jnp.float32)[:, :, None]
    exch_expect = (mask_expect * anchor[jnp.argmax(labels, axis=1)]
                   + (1.0 - mask_expect) * features)
    jax.block_until_ready((cache_expect, count_expect, exch_expect))

    # max_tile_lanes=512 so this small example (F=1024) exercises the multi-tile path.
    exch, new_cache, new_count, run_count = exchnet_local_exchange(
        features, labels, anchor, cache, count, rand_u,
        p=p, training=True, run_count=100, min_count=50,
        max_tile_lanes=512)
    jax.block_until_ready((exch, new_cache, new_count))

    assert jnp.allclose(exch, exch_expect, atol=1e-4), "exchanged features mismatch"
    assert jnp.allclose(new_cache, cache_expect, atol=1e-4), "cache mismatch"
    assert jnp.allclose(new_count, count_expect, atol=1e-4), "count mismatch"

    print("KERNEL_OK")
</pallas_src>

<mosaic_0001>
module attributes {stable_mosaic.version = 11 : i64} {
  func.func @_exchange_kernel(%arg0: i32, %arg1: memref<4x512xf32, #tpu.memory_space<vmem>>, %arg2: memref<4x512xf32, #tpu.memory_space<vmem>>, %arg3: memref<4x4xf32, #tpu.memory_space<vmem>>, %arg4: memref<4x8xf32, #tpu.memory_space<vmem>>, %arg5: memref<4x512xf32, #tpu.memory_space<vmem>>, %arg6: memref<4x512xf32, #tpu.memory_space<vmem>>, %arg7: memref<4x512xf32, #tpu.memory_space<vmem>>) attributes {dimension_semantics = [#tpu.dimension_semantics<parallel>], iteration_bounds = array<i64: 2>, scalar_prefetch = 0 : i64, scratch_operands = 0 : i64, tpu.core_type = #tpu.core_type<tc>, window_params = [{transform_indices = @transform_0, window_bounds = array<i64: 4, 512>}, {transform_indices = @transform_1, window_bounds = array<i64: 4, 512>}, {pipeline_mode = #tpu.pipeline_mode<synchronous>, transform_indices = @transform_2, window_bounds = array<i64: 4, 4>}, {pipeline_mode = #tpu.pipeline_mode<synchronous>, transform_indices = @transform_3, window_bounds = array<i64: 4, 8>}, {transform_indices = @transform_4, window_bounds = array<i64: 4, 512>}, {transform_indices = @transform_5, window_bounds = array<i64: 4, 512>}, {transform_indices = @transform_6, window_bounds = array<i64: 4, 512>}]} {
    %c0 = arith.constant 0 : index
    %c0_0 = arith.constant 0 : index
    %0 = vector.load %arg1[%c0, %c0_0] : memref<4x512xf32, #tpu.memory_space<vmem>>, vector<4x512xf32>
    %c0_1 = arith.constant 0 : index
    %c0_2 = arith.constant 0 : index
    %1 = vector.load %arg3[%c0_1, %c0_2] : memref<4x4xf32, #tpu.memory_space<vmem>>, vector<4x4xf32>
    %cst = arith.constant dense<0.000000e+00> : vector<4x512xf32>
    %2 = tpu.matmul %1, %0, %cst {dimension_numbers = #tpu.dot_dimension_numbers<[0], [0], [1], [1], [0, 1, 1, 1], [], []>} : vector<4x4xf32>, vector<4x512xf32>, vector<4x512xf32> -> vector<4x512xf32>
    %c0_3 = arith.constant 0 : index
    %c0_4 = arith.constant 0 : index
    %3 = vector.load %arg5[%c0_3, %c0_4] : memref<4x512xf32, #tpu.memory_space<vmem>>, vector<4x512xf32>
    %4 = arith.addf %3, %2 : vector<4x512xf32>
    %c0_5 = arith.constant 0 : index
    %c0_6 = arith.constant 0 : index
    %5 = vector.load %arg7[%c0_5, %c0_6] : memref<4x512xf32, #tpu.memory_space<vmem>>, vector<4x512xf32>
    tpu.vector_store %arg7[%c0_5, %c0_6], %4 {strides = array<i32>} : memref<4x512xf32, #tpu.memory_space<vmem>>, vector<4x512xf32>,
    %6 = tpu.iota {dimensions = array<i32: 1>} : vector<8x512xi32>
    %7 = tpu.iota {dimensions = array<i32: 0>} : vector<8x512xi32>
    %c512_i32 = arith.constant 512 : i32
    %8 = arith.muli %arg0, %c512_i32 : i32
    %9 = vector.broadcast %8 : i32 to vector<8x512xi32>
    %10 = arith.addi %9, %6 : vector<8x512xi32>
    %c128_i32 = arith.constant 128 : i32
    %11 = vector.broadcast %c128_i32 : i32 to vector<8x512xi32>
    %12 = arith.muli %7, %11 : vector<8x512xi32>
    %13 = arith.cmpi sge, %10, %12 : vector<8x512xi32>
    %c128_i32_7 = arith.constant 128 : i32
    %14 = vector.broadcast %c128_i32_7 : i32 to vector<8x512xi32>
    %15 = arith.addi %12, %14 : vector<8x512xi32>
    %16 = arith.cmpi slt, %10, %15 : vector<8x512xi32>
    %17 = arith.andi %13, %16 : vector<8x512xi1>
    %18 = arith.extui %17 : vector<8x512xi1> to vector<8x512xi32>
    %19 = arith.sitofp %18 : vector<8x512xi32> to vector<8x512xf32>
    %c0_8 = arith.constant 0 : index
    %c0_9 = arith.constant 0 : index
    %20 = vector.load %arg4[%c0_8, %c0_9] : memref<4x8xf32, #tpu.memory_space<vmem>>, vector<4x8xf32>
    %cst_10 = arith.constant dense<0.000000e+00> : vector<4x512xf32>
    %21 = tpu.matmul %20, %19, %cst_10 {dimension_numbers = #tpu.dot_dimension_numbers<[1], [0], [0], [1], [0, 0, 1, 1], [], []>} : vector<4x8xf32>, vector<8x512xf32>, vector<4x512xf32> -> vector<4x512xf32>
    %cst_11 = arith.constant 5.000000e-01 : f32
    %22 = vector.broadcast %cst_11 : f32 to vector<4x512xf32>
    %23 = arith.cmpf ogt, %21, %22 : vector<4x512xf32>
    %c0_12 = arith.constant 0 : index
    %c0_13 = arith.constant 0 : index
    %24 = vector.load %arg2[%c0_12, %c0_13] : memref<4x512xf32, #tpu.memory_space<vmem>>, vector<4x512xf32>
    %25 = arith.select %23, %24, %0 : vector<4x512xi1>, vector<4x512xf32>
    %c0_14 = arith.constant 0 : index
    %c0_15 = arith.constant 0 : index
    %26 = vector.load %arg6[%c0_14, %c0_15] : memref<4x512xf32, #tpu.memory_space<vmem>>, vector<4x512xf32>
    tpu.vector_store %arg6[%c0_14, %c0_15], %25 {strides = array<i32>} : memref<4x512xf32, #tpu.memory_space<vmem>>, vector<4x512xf32>,
    return
  }
  func.func @transform_0(%arg0: i32) -> (i32, i32) {
    %c0_i32 = arith.constant 0 : i32
    %c0_i32_0 = arith.constant 0 : i32
    return %c0_i32, %arg0 : i32, i32
  }
  func.func @transform_1(%arg0: i32) -> (i32, i32) {
    %c0_i32 = arith.constant 0 : i32
    %c0_i32_0 = arith.constant 0 : i32
    return %c0_i32, %arg0 : i32, i32
  }
  func.func @transform_2(%arg0: i32) -> (i32, i32) {
    %c0_i32 = arith.constant 0 : i32
    %c0_i32_0 = arith.constant 0 : i32
    %c0_i32_1 = arith.constant 0 : i32
    return %c0_i32, %c0_i32_0 : i32, i32
  }
  func.func @transform_3(%arg0: i32) -> (i32, i32) {
    %c0_i32 = arith.constant 0 : i32
    %c0_i32_0 = arith.constant 0 : i32
    %c0_i32_1 = arith.constant 0 : i32
    return %c0_i32, %c0_i32_0 : i32, i32
  }
  func.func @transform_4(%arg0: i32) -> (i32, i32) {
    %c0_i32 = arith.constant 0 : i32
    %c0_i32_0 = arith.constant 0 : i32
    return %c0_i32, %arg0 : i32, i32
  }
  func.func @transform_5(%arg0: i32) -> (i32, i32) {
    %c0_i32 = arith.constant 0 : i32
    %c0_i32_0 = arith.constant 0 : i32
    return %c0_i32, %arg0 : i32, i32
  }
  func.func @transform_6(%arg0: i32) -> (i32, i32) {
    %c0_i32 = arith.constant 0 : i32
    %c0_i32_0 = arith.constant 0 : i32
    return %c0_i32, %arg0 : i32, i32
  }
}

</mosaic_0001>

<llo_original>
// kernel: tpu_custom_call.1
$region0: #{tpu_custom_call.1}
  #allocation0 [shape = 'u32[]', space=smem, size = 0x4, offset = 0x4, fixed_abs, tag = 'smem constant byte address 0x4 - core index']
  #allocation1 [shape = 'u32[144,128]{1,0:T(1,128)}', space=vmem, size = 0x12000, scoped, tag = 'internal scratch']
  %s0 = inlined_call_operand.vmem [shape: f32[4,1024], index: 0, kind: input, shape index: {}]
  %s1 = inlined_call_operand.vmem [shape: f32[4,1024], index: 1, kind: input, shape index: {}]
  %s2 = inlined_call_operand.vmem [shape: f32[4,4], index: 2, kind: input, shape index: {}]
  %s3 = inlined_call_operand.hbm [shape: f32[4,8], index: 3, kind: input, shape index: {}]
  %s4 = inlined_call_operand.hbm [shape: f32[4,1024], index: 4, kind: input, shape index: {}, may-alias: {4,6}]
  %s5 = inlined_call_operand.hbm [shape: f32[4,1024], index: 5, kind: output, shape index: {0}]
  %s6 = inlined_call_operand.hbm [shape: f32[4,1024], index: 6, kind: output, shape index: {1}, may-alias: {4,6}]
  %7 = xla_tuple %s5, %s6
  %s8 = sld [smem:[#allocation0]]
  $region69: #{tpu_custom_call.1} parent=0
    _
  %s10 = ssub.s32 1, %s8
  %s11 = scalar_select 0, %s10, %s8
  $region1: #{tpu_custom_call.1} parent=0
    #allocation2 [shape = 'u8[2048]{0}', space=vmem, size = 0x800, scoped, tag = 'input window, operand 3, single buffered']
    #allocation3 [shape = 's32[2]{0}', space=sflag, size = 0x8, scoped, tag = 'scoped memory for tpu_custom_call.1']
    #allocation4 [shape = 's32[2]{0}', space=sflag, size = 0x8, scoped, tag = 'scoped memory for tpu_custom_call.1']
    #allocation5 [shape = 'u8[16384]{0}', space=vmem, size = 0x4000, scoped, tag = 'input window, operand 4']
    #allocation6 [shape = 's32[2]{0}', space=sflag, size = 0x8, scoped, tag = 'scoped memory for tpu_custom_call.1']
    #allocation7 [shape = 'u8[16384]{0}', space=vmem, size = 0x4000, scoped, tag = 'output window, operand 0']
    #allocation8 [shape = 'u8[16384]{0}', space=vmem, size = 0x4000, scoped, tag = 'output window, operand 1']
    #allocation9 [shape = 's32[2]{0}', space=sflag, size = 0x8, scoped, tag = 'scoped memory for tpu_custom_call.1']
    %12 = vsyncpa [#allocation3], 0
    %13 = vsyncpa [#allocation6], 0
    %s14 = scalar_lea.sflag [#allocation6], 1
    %15 = vsyncpa %s14, 0
    %16 = vsyncpa [#allocation4], 0
    %s17 = scalar_lea.sflag [#allocation4], 1
    %18 = vsyncpa %s17, 0
    %19 = vsyncpa [#allocation9], 0
    %s20 = scalar_lea.sflag [#allocation9], 1
    %21 = vsyncpa %s20, 0
    loop: start=0, step=1, limit=4
    $region2: #{tpu_custom_call.1} parent=1 // loop_pre_header
      _
    $region3: #{tpu_custom_call.1} parent=1 // loop_header
      %s23 = sphi 0, %s27
      %p24 = scmp.ge.s32.totalorder %s23, 4
      %s33 = sphi 0, %s35
      %s36 = sphi 0, %s33
      %s37 = sphi 0, %s36
      %s53 = sphi 0, %s37
      %s59 = sphi 0, %s61
      %s62 = sphi 0, %s59
      %s63 = sphi 0, %s62
      %s79 = sphi 0, %s63
      %s83 = sphi 0, %s83
      %s85 = sphi 0, %s83
      %s86 = sphi 0, %s85
      %s100 = sphi 0, %s86
      %s104 = sphi 0, %s104
      %s106 = sphi 0, %s104
      %s107 = sphi 0, %s106
      %s121 = sphi 0, %s107
      %s127 = sphi 0, %s129
      %s130 = sphi 0, %s127
      %s131 = sphi 0, %s130
      %s147 = sphi 0, %s131
      %s153 = sphi 0, %s155
      %s156 = sphi 0, %s153
      %s157 = sphi 0, %s156
      %s173 = sphi 0, %s157
      %s179 = sphi 0, %s181
      %s182 = sphi 0, %s179
      %s183 = sphi 0, %s182
      %s199 = sphi 0, %s183
    $region4: #{tpu_custom_call.1} parent=1 // loop_header_branch
      %26 = sbr.rel (%p24) target = $region8
    $region5: #{tpu_custom_call.1} parent=1 // loop_body
      %s28 = ssub.s32 %s23, 1
      %s29 = ssub.s32 %s23, 2
      %s30 = sadd.s32 %s23, 1
      %s31 = ssub.s32 %s23, %s30
      %p32 = scmp.eq.s32.totalorder %s31, 0
      %s34 = sadd.s32 %s33, 1
      %s35 = scalar_select %p32, %s33, %s34
      %p38 = pneg %p32
      %p39 = scmp.eq.s32.totalorder %s23, 1
      %p40 = por %p38, %p39
      %p41 = scmp.ne.s32.totalorder %s33, %s36
      %p42 = scmp.eq.s32.totalorder %s23, 0
      %p43 = por %p41, %p42
      %p44 = scmp.ne.s32.totalorder %s33, %s36
      %p45 = scmp.eq.s32.totalorder %s28, 1
      %p46 = por %p44, %p45
      %p47 = scmp.ne.s32.totalorder %s36, %s37
      %p48 = scmp.eq.s32.totalorder %s28, 0
      %p49 = por %p47, %p48
      %p50 = scmp.ne.s32.totalorder %s36, %s37
      %p51 = scmp.eq.s32.totalorder %s29, 1
      %p52 = por %p50, %p51
      %p54 = scmp.ne.s32.totalorder %s37, %s53
      %p55 = scmp.eq.s32.totalorder %s29, 0
      %p56 = por %p54, %p55
      %s57 = ssub.s32 %s23, %s30
      %p58 = scmp.eq.s32.totalorder %s57, 0
      %s60 = sadd.s32 %s59, 1
      %s61 = scalar_select %p58, %s59, %s60
      %p64 = pneg %p58
      %p65 = scmp.eq.s32.totalorder %s23, 1
      %p66 = por %p64, %p65
      %p67 = scmp.ne.s32.totalorder %s59, %s62
      %p68 = scmp.eq.s32.totalorder %s23, 0
      %p69 = por %p67, %p68
      %p70 = scmp.ne.s32.totalorder %s59, %s62
      %p71 = scmp.eq.s32.totalorder %s28, 1
      %p72 = por %p70, %p71
      %p73 = scmp.ne.s32.totalorder %s62, %s63
      %p74 = scmp.eq.s32.totalorder %s28, 0
      %p75 = por %p73, %p74
      %p76 = scmp.ne.s32.totalorder %s62, %s63
      %p77 = scmp.eq.s32.totalorder %s29, 1
      %p78 = por %p76, %p77
      %p80 = scmp.ne.s32.totalorder %s63, %s79
      %p81 = scmp.eq.s32.totalorder %s29, 0
      %p82 = por %p80, %p81
      %s84 = sadd.s32 %s83, 1
      %p87 = scmp.eq.s32.totalorder %s23, 1
      %p88 = scmp.ne.s32.totalorder %s83, %s85
      %p89 = scmp.eq.s32.totalorder %s23, 0
      %p90 = por %p88, %p89
      %p91 = scmp.ne.s32.totalorder %s83, %s85
      %p92 = scmp.eq.s32.totalorder %s28, 1
      %p93 = por %p91, %p92
      %p94 = scmp.ne.s32.totalorder %s85, %s86
      %p95 = scmp.eq.s32.totalorder %s28, 0
      %p96 = por %p94, %p95
      %p97 = scmp.ne.s32.totalorder %s85, %s86
      %p98 = scmp.eq.s32.totalorder %s29, 1
      %p99 = por %p97, %p98
      %p101 = scmp.ne.s32.totalorder %s86, %s100
      %p102 = scmp.eq.s32.totalorder %s29, 0
      %p103 = por %p101, %p102
      %s105 = sadd.s32 %s104, 1
      %p108 = scmp.eq.s32.totalorder %s23, 1
      %p109 = scmp.ne.s32.totalorder %s104, %s106
      %p110 = scmp.eq.s32.totalorder %s23, 0
      %p111 = por %p109, %p110
      %p112 = scmp.ne.s32.totalorder %s104, %s106
      %p113 = scmp.eq.s32.totalorder %s28, 1
      %p114 = por %p112, %p113
      %p115 = scmp.ne.s32.totalorder %s106, %s107
      %p116 = scmp.eq.s32.totalorder %s28, 0
      %p117 = por %p115, %p116
      %p118 = scmp.ne.s32.totalorder %s106, %s107
      %p119 = scmp.eq.s32.totalorder %s29, 1
      %p120 = por %p118, %p119
      %p122 = scmp.ne.s32.totalorder %s107, %s121
      %p123 = scmp.eq.s32.totalorder %s29, 0
      %p124 = por %p122, %p123
      %s125 = ssub.s32 %s23, %s30
      %p126 = scmp.eq.s32.totalorder %s125, 0
      %s128 = sadd.s32 %s127, 1
      %s129 = scalar_select %p126, %s127, %s128
      %p132 = pneg %p126
      %p133 = scmp.eq.s32.totalorder %s23, 1
      %p134 = por %p132, %p133
      %p135 = scmp.ne.s32.totalorder %s127, %s130
      %p136 = scmp.eq.s32.totalorder %s23, 0
      %p137 = por %p135, %p136
      %p138 = scmp.ne.s32.totalorder %s127, %s130
      %p139 = scmp.eq.s32.totalorder %s28, 1
      %p140 = por %p138, %p139
      %p141 = scmp.ne.s32.totalorder %s130, %s131
      %p142 = scmp.eq.s32.totalorder %s28, 0
      %p143 = por %p141, %p142
      %p144 = scmp.ne.s32.totalorder %s130, %s131
      %p145 = scmp.eq.s32.totalorder %s29, 1
      %p146 = por %p144, %p145
      %p148 = scmp.ne.s32.totalorder %s131, %s147
      %p149 = scmp.eq.s32.totalorder %s29, 0
      %p150 = por %p148, %p149
      %s151 = ssub.s32 %s23, %s30
      %p152 = scmp.eq.s32.totalorder %s151, 0
      %s154 = sadd.s32 %s153, 1
      %s155 = scalar_select %p152, %s153, %s154
      %p158 = pneg %p152
      %p159 = scmp.eq.s32.totalorder %s23, 1
      %p160 = por %p158, %p159
      %p161 = scmp.ne.s32.totalorder %s153, %s156
      %p162 = scmp.eq.s32.totalorder %s23, 0
      %p163 = por %p161, %p162
      %p164 = scmp.ne.s32.totalorder %s153, %s156
      %p165 = scmp.eq.s32.totalorder %s28, 1
      %p166 = por %p164, %p165
      %p167 = scmp.ne.s32.totalorder %s156, %s157
      %p168 = scmp.eq.s32.totalorder %s28, 0
      %p169 = por %p167, %p168
      %p170 = scmp.ne.s32.totalorder %s156, %s157
      %p171 = scmp.eq.s32.totalorder %s29, 1
      %p172 = por %p170, %p171
      %p174 = scmp.ne.s32.totalorder %s157, %s173
      %p175 = scmp.eq.s32.totalorder %s29, 0
      %p176 = por %p174, %p175
      %s177 = ssub.s32 %s23, %s30
      %p178 = scmp.eq.s32.totalorder %s177, 0
      %s180 = sadd.s32 %s179, 1
      %s181 = scalar_select %p178, %s179, %s180
      %p184 = pneg %p178
      %p185 = scmp.eq.s32.totalorder %s23, 1
      %p186 = por %p184, %p185
      %p187 = scmp.ne.s32.totalorder %s179, %s182
      %p188 = scmp.eq.s32.totalorder %s23, 0
      %p189 = por %p187, %p188
      %p190 = scmp.ne.s32.totalorder %s179, %s182
      %p191 = scmp.eq.s32.totalorder %s28, 1
      %p192 = por %p190, %p191
      %p193 = scmp.ne.s32.totalorder %s182, %s183
      %p194 = scmp.eq.s32.totalorder %s28, 0
      %p195 = por %p193, %p194
      %p196 = scmp.ne.s32.totalorder %s182, %s183
      %p197 = scmp.eq.s32.totalorder %s29, 1
      %p198 = por %p196, %p197
      %p200 = scmp.ne.s32.totalorder %s183, %s199
      %p201 = scmp.eq.s32.totalorder %s29, 0
      %p202 = por %p200, %p201
      %p203 = scmp.le.s32.totalorder 1, %s23
      %p204 = scmp.lt.s32.totalorder %s23, 3
      %p205 = pnand %p203, %p204
      %p206 = pneg %p205
      // Predicated region
      $region9: #{tpu_custom_call.1} parent=5 // pred_check
        _
      $region10: #{tpu_custom_call.1} parent=5 // pred_check_branch
        %208 = sbr.rel (%p205) target = $region12
      $region11: #{tpu_custom_call.1} parent=5 // pred_region
        %s209 = ssub.s32 %s23, 1
        // Predicated region
        $region13: #{tpu_custom_call.1} parent=11 // pred_check
          %p210 = pneg %p96
        $region14: #{tpu_custom_call.1} parent=11 // pred_check_branch
          %212 = sbr.rel (%p210) target = $region16
        $region15: #{tpu_custom_call.1} parent=11 // pred_region
          _
        $region16: #{tpu_custom_call.1} parent=11 // pred_fallthru
          _
        // Predicated region
        $region17: #{tpu_custom_call.1} parent=11 // pred_check
          %p213 = pneg %p117
        $region18: #{tpu_custom_call.1} parent=11 // pred_check_branch
          %215 = sbr.rel (%p213) target = $region20
        $region19: #{tpu_custom_call.1} parent=11 // pred_region
          %s217 = ssub.s32 64, 64
          %218 = vsyncadd [#allocation3], %s217
          %s220 = sshll.u32 [#allocation2], 4
          %s221 = int_to_ptr.vmem [resolvable:$true] %s220
          %223 = dma.hbm_to_vmem [thread:$0]  %s3, 64, %s221, [#allocation3]
        $region20: #{tpu_custom_call.1} parent=11 // pred_fallthru
          _
      $region12: #{tpu_custom_call.1} parent=5 // pred_fallthru
        _
      %p224 = scmp.lt.s32.totalorder %s23, 2
      // Predicated region
      $region21: #{tpu_custom_call.1} parent=5 // pred_check
        %p225 = pneg %p224
      $region22: #{tpu_custom_call.1} parent=5 // pred_check_branch
        %227 = sbr.rel (%p225) target = $region24
      $region23: #{tpu_custom_call.1} parent=5 // pred_region
        // Predicated region
        $region25: #{tpu_custom_call.1} parent=23 // pred_check
          %p228 = pneg %p43
        $region26: #{tpu_custom_call.1} parent=23 // pred_check_branch
          %230 = sbr.rel (%p228) target = $region28
        $region27: #{tpu_custom_call.1} parent=23 // pred_region
          %s231 = smul.u32 4, %s23
          %p232 = scmp.lt.s32.totalorder %s231, 7
          %s233 = scalar_select %p232, %s231, 7
          %s234 = smul.addr %s233, 4
          %s235 = scalar_lea.vmem %s0, %s234
          %s236 = smul.u32 4, %s23
        $region28: #{tpu_custom_call.1} parent=23 // pred_fallthru
          _
        // Predicated region
        $region29: #{tpu_custom_call.1} parent=23 // pred_check
          %p237 = pneg %p69
        $region30: #{tpu_custom_call.1} parent=23 // pred_check_branch
          %239 = sbr.rel (%p237) target = $region32
        $region31: #{tpu_custom_call.1} parent=23 // pred_region
          %s240 = smul.u32 4, %s23
          %p241 = scmp.lt.s32.totalorder %s240, 7
          %s242 = scalar_select %p241, %s240, 7
          %s243 = smul.addr %s242, 4
          %s244 = scalar_lea.vmem %s1, %s243
          %s245 = smul.u32 4, %s23
        $region32: #{tpu_custom_call.1} parent=23 // pred_fallthru
          _
        // Predicated region
        $region33: #{tpu_custom_call.1} parent=23 // pred_check
          %p246 = pneg %p137
        $region34: #{tpu_custom_call.1} parent=23 // pred_check_branch
          %248 = sbr.rel (%p246) target = $region36
        $region35: #{tpu_custom_call.1} parent=23 // pred_region
          %s249 = sand.u32 %s127, 1
          %s250 = scalar_lea.sflag [#allocation6], %s249
          %s251 = sand.u32 %s127, 1
          %s252 = smul.addr %s251, 16
          %s253 = scalar_lea.vmem [#allocation5], %s252
          %s254 = smul.u32 4, %s23
          %s256 = ssub.s32 256, 256
          %257 = vsyncadd %s250, %s256
          %s258 = smul.addr %s254, 64
          %s259 = scalar_lea.hbm %s4, %s258
          %s261 = sshll.u32 %s253, 4
          %s262 = int_to_ptr.vmem [resolvable:$true] %s261
          %264 = dma.hbm_to_vmem [thread:$0]  %s259, 256, %s262, %s250
        $region36: #{tpu_custom_call.1} parent=23 // pred_fallthru
          _
      $region24: #{tpu_custom_call.1} parent=5 // pred_fallthru
        _
      %p265 = scmp.le.s32.totalorder 1, %s23
      %p266 = scmp.lt.s32.totalorder %s23, 3
      %p267 = pnand %p265, %p266
      %p268 = pneg %p267
      // Predicated region
      $region37: #{tpu_custom_call.1} parent=5 // pred_check
        _
      $region38: #{tpu_custom_call.1} parent=5 // pred_check_branch
        %270 = sbr.rel (%p267) target = $region40
      $region39: #{tpu_custom_call.1} parent=5 // pred_region
        %s271 = ssub.s32 %s23, 1
        // Predicated region
        $region41: #{tpu_custom_call.1} parent=39 // pred_check
          %p272 = pneg %p117
        $region42: #{tpu_custom_call.1} parent=39 // pred_check_branch
          %274 = sbr.rel (%p272) target = $region44
        $region43: #{tpu_custom_call.1} parent=39 // pred_region
          %275 = dma.done [#allocation3], 64
        $region44: #{tpu_custom_call.1} parent=39 // pred_fallthru
          _
        %s276 = sand.u32 %s130, 1
        %s277 = scalar_lea.sflag [#allocation6], %s276
        %s278 = sand.u32 %s130, 1
        %s279 = smul.addr %s278, 16
        %s280 = scalar_lea.vmem [#allocation5], %s279
        // Predicated region
        $region45: #{tpu_custom_call.1} parent=39 // pred_check
          %p281 = pneg %p143
        $region46: #{tpu_custom_call.1} parent=39 // pred_check_branch
          %283 = sbr.rel (%p281) target = $region48
        $region47: #{tpu_custom_call.1} parent=39 // pred_region
          %284 = dma.done %s277, 256
        $region48: #{tpu_custom_call.1} parent=39 // pred_fallthru
          _
        %s285 = smul.u32 4, %s28
        %p286 = scmp.lt.s32.totalorder %s285, 7
        %s287 = scalar_select %p286, %s285, 7
        %s288 = smul.addr %s287, 4
        %s289 = scalar_lea.vmem %s0, %s288
        %p290 = pneg %p49
        %p291 = pneg %p46
        %s292 = smul.u32 4, %s28
        %p293 = scmp.lt.s32.totalorder %s292, 7
        %s294 = scalar_select %p293, %s292, 7
        %s295 = smul.addr %s294, 4
        %s296 = scalar_lea.vmem %s1, %s295
        %p297 = pneg %p75
        %p298 = pneg %p72
        %p299 = pneg %p96
        %p300 = pneg %p93
        %p301 = pneg %p117
        %p302 = pneg %p114
        %s303 = sand.u32 %s130, 1
        %s304 = scalar_lea.sflag [#allocation6], %s303
        %s305 = sand.u32 %s130, 1
        %s306 = smul.addr %s305, 16
        %s307 = scalar_lea.vmem [#allocation5], %s306
        %p308 = pneg %p143
        %p309 = pneg %p140
        %p310 = pneg %p169
        %p311 = pneg %p166
        %s312 = sand.u32 %s156, 1
        %s313 = scalar_lea.sflag [#allocation4], %s312
        %s314 = sand.u32 %s156, 1
        %s315 = smul.addr %s314, 16
        %s316 = scalar_lea.vmem [#allocation7], %s315
        %p317 = pneg %p195
        %p318 = pneg %p192
        %s319 = sand.u32 %s182, 1
        %s320 = scalar_lea.sflag [#allocation9], %s319
        %s321 = sand.u32 %s182, 1
        %s322 = smul.addr %s321, 16
        %s323 = scalar_lea.vmem [#allocation8], %s322
        %s324 = smul.u32 4, %s28
        %p325 = scmp.lt.s32.totalorder %s324, 7
        %s326 = scalar_select %p325, %s324, 7
        %s327 = smul.addr %s326, 4
        %s328 = scalar_lea.vmem %s0, %s327
        %s329 = smul.u32 4, %s28
        %s330 = smul.u32 4, %s28
        %p331 = scmp.lt.s32.totalorder %s330, 7
        %s332 = scalar_select %p331, %s330, 7
        %s333 = smul.addr %s332, 4
        %s334 = scalar_lea.vmem %s1, %s333
        %s335 = smul.u32 4, %s28
        %s336 = smul.u32 4, %s28
        %s337 = smul.u32 4, %s28
        %s338 = smul.u32 4, %s28
        %v339 = vld [vmem:[%s328] sm:$0xff]
        %v340 = vld [vmem:[%s328 + $0x8] sm:$0xff]
        %v341 = vld [vmem:[%s2] sm:$0xf]
        %342 = vxpose.xlu0.b32.start [1/16] %v341, 128
        %343 = vxpose.xlu0.b32.cont [2/16] 0.0, 128
        %344 = vxpose.xlu0.b32.cont [3/16] 0.0, 128
        %345 = vxpose.xlu0.b32.cont [4/16] 0.0, 128
        %346 = vxpose.xlu0.b32.cont [5/16] 0.0, 128
        %347 = vxpose.xlu0.b32.cont [6/16] 0.0, 128
        %348 = vxpose.xlu0.b32.cont [7/16] 0.0, 128
        %349 = vxpose.xlu0.b32.cont [8/16] 0.0, 128
        %350 = vxpose.xlu0.b32.cont [9/16] 0.0, 128
        %351 = vxpose.xlu0.b32.cont [10/16] 0.0, 128
        %352 = vxpose.xlu0.b32.cont [11/16] 0.0, 128
        %353 = vxpose.xlu0.b32.cont [12/16] 0.0, 128
        %354 = vxpose.xlu0.b32.cont [13/16] 0.0, 128
        %355 = vxpose.xlu0.b32.cont [14/16] 0.0, 128
        %356 = vxpose.xlu0.b32.cont [15/16] 0.0, 128
        %357 = vxpose.xlu0.b32.end [16/16] 0.0, 128
        %v358 = vpop.trf.xlu0
        %v359 = vpop.trf.xlu0
        %v360 = vpop.trf.xlu0
        %v361 = vpop.trf.xlu0
        %v362 = vpop.trf.xlu0
        %v363 = vpop.trf.xlu0
        %v364 = vpop.trf.xlu0
        %v365 = vpop.trf.xlu0
        %v366 = vpop.trf.xlu0
        %v367 = vpop.trf.xlu0
        %v368 = vpop.trf.xlu0
        %v369 = vpop.trf.xlu0
        %v370 = vpop.trf.xlu0
        %v371 = vpop.trf.xlu0
        %v372 = vpop.trf.xlu0
        %v373 = vpop.trf.xlu0
        %v376 = vcombine.high %v339, %v339
        %v377 = vcombine.high %v340, %v340
        %vm378 = vcmask 31744
        %v380 = vsel %vm378, %v358, 0
        %vm382 = vcmask 1043456
        %v383 = vsel %vm382, %v339, 0
        %v385 = vsel %vm382, %v376, 0
        %v387 = vsel %vm382, %v340, 0
        %v389 = vsel %vm382, %v377, 0
        %391 = vmatprep.subr.mxu0 %v385
        %392 = vmatpush1.msra.mxu0 %v383
        %393 = vmatprep.subr.mxu0 0.0
        %394 = vmatpush1.msra.mxu0 0.0
        %395 = vmatprep.subr.mxu0 0.0
        %396 = vmatpush1.msra.mxu0 0.0
        %397 = vmatprep.subr.mxu0 0.0
        %398 = vmatpush1.msra.mxu0 0.0
        %399 = vmatprep.subr.mxu0 0.0
        %400 = vmatpush1.msra.mxu0 0.0
        %401 = vmatprep.subr.mxu0 0.0
        %402 = vmatpush1.msra.mxu0 0.0
        %403 = vmatprep.subr.mxu0 0.0
        %404 = vmatpush1.msra.mxu0 0.0
        %405 = vmatprep.subr.mxu0 0.0
        %406 = vmatpush1.msra.mxu0 0.0
        %407 = vmatprep.subr.mxu0 0.0
        %408 = vmatpush1.msra.mxu0 0.0
        %409 = vmatprep.subr.mxu0 0.0
        %410 = vmatpush1.msra.mxu0 0.0
        %411 = vmatprep.subr.mxu0 0.0
        %412 = vmatpush1.msra.mxu0 0.0
        %413 = vmatprep.subr.mxu0 0.0
        %414 = vmatpush1.msra.mxu0 0.0
        %415 = vmatprep.subr.mxu0 0.0
        %416 = vmatpush1.msra.mxu0 0.0
        %417 = vmatprep.subr.mxu0 0.0
        %418 = vmatpush1.msra.mxu0 0.0
        %419 = vmatprep.subr.mxu0 0.0
        %420 = vmatpush1.msra.mxu0 0.0
        %421 = vmatprep.subr.mxu0 0.0
        %422 = vmatpush1.msra.mxu0 0.0
        %423 = vmatprep.subr.mxu0 0.0
        %424 = vmatpush1.msra.mxu0 0.0
        %425 = vmatprep.subr.mxu0 0.0
        %426 = vmatpush1.msra.mxu0 0.0
        %427 = vmatprep.subr.mxu0 0.0
        %428 = vmatpush1.msra.mxu0 0.0
        %429 = vmatprep.subr.mxu0 0.0
        %430 = vmatpush1.msra.mxu0 0.0
        %431 = vmatprep.subr.mxu0 0.0
        %432 = vmatpush1.msra.mxu0 0.0
        %433 = vmatprep.subr.mxu0 0.0
        %434 = vmatpush1.msra.mxu0 0.0
        %435 = vmatprep.subr.mxu0 0.0
        %436 = vmatpush1.msra.mxu0 0.0
        %437 = vmatprep.subr.mxu0 0.0
        %438 = vmatpush1.msra.mxu0 0.0
        %439 = vmatprep.subr.mxu0 0.0
        %440 = vmatpush1.msra.mxu0 0.0
        %441 = vmatprep.subr.mxu0 0.0
        %442 = vmatpush1.msra.mxu0 0.0
        %443 = vmatprep.subr.mxu0 0.0
        %444 = vmatpush1.msra.mxu0 0.0
        %445 = vmatprep.subr.mxu0 0.0
        %446 = vmatpush1.msra.mxu0 0.0
        %447 = vmatprep.subr.mxu0 0.0
        %448 = vmatpush1.msra.mxu0 0.0
        %449 = vmatprep.subr.mxu0 0.0
        %450 = vmatpush1.msra.mxu0 0.0
        %451 = vmatprep.subr.mxu0 0.0
        %452 = vmatpush1.msra.mxu0 0.0
        %453 = vmatprep.subr.mxu0 0.0
        %454 = vmatpush1.msra.mxu0 0.0
        %455 = vmatprep.mubr.f32.mxu0 0.0
        %456 = vmatmul.mubr.f32.gmra.mrb[0].mxu0 %v380
        %v457 = vpop.f32.mrb[0].mxu0
        %v458 = vadd.f32 0.0, %v457
        %v459 = vpop.f32.mrb[0].mxu0
        %v460 = vadd.f32 0.0, %v459
        %461 = vdwg.mxu0
        %462 = vmatprep.subr.mxu0 %v389
        %463 = vmatpush1.msra.mxu0 %v387
        %464 = vmatprep.subr.mxu0 0.0
        %465 = vmatpush1.msra.mxu0 0.0
        %466 = vmatprep.subr.mxu0 0.0
        %467 = vmatpush1.msra.mxu0 0.0
        %468 = vmatprep.subr.mxu0 0.0
        %469 = vmatpush1.msra.mxu0 0.0
        %470 = vmatprep.subr.mxu0 0.0
        %471 = vmatpush1.msra.mxu0 0.0
        %472 = vmatprep.subr.mxu0 0.0
        %473 = vmatpush1.msra.mxu0 0.0
        %474 = vmatprep.subr.mxu0 0.0
        %475 = vmatpush1.msra.mxu0 0.0
        %476 = vmatprep.subr.mxu0 0.0
        %477 = vmatpush1.msra.mxu0 0.0
        %478 = vmatprep.subr.mxu0 0.0
        %479 = vmatpush1.msra.mxu0 0.0
        %480 = vmatprep.subr.mxu0 0.0
        %481 = vmatpush1.msra.mxu0 0.0
        %482 = vmatprep.subr.mxu0 0.0
        %483 = vmatpush1.msra.mxu0 0.0
        %484 = vmatprep.subr.mxu0 0.0
        %485 = vmatpush1.msra.mxu0 0.0
        %486 = vmatprep.subr.mxu0 0.0
        %487 = vmatpush1.msra.mxu0 0.0
        %488 = vmatprep.subr.mxu0 0.0
        %489 = vmatpush1.msra.mxu0 0.0
        %490 = vmatprep.subr.mxu0 0.0
        %491 = vmatpush1.msra.mxu0 0.0
        %492 = vmatprep.subr.mxu0 0.0
        %493 = vmatpush1.msra.mxu0 0.0
        %494 = vmatprep.subr.mxu0 0.0
        %495 = vmatpush1.msra.mxu0 0.0
        %496 = vmatprep.subr.mxu0 0.0
        %497 = vmatpush1.msra.mxu0 0.0
        %498 = vmatprep.subr.mxu0 0.0
        %499 = vmatpush1.msra.mxu0 0.0
        %500 = vmatprep.subr.mxu0 0.0
        %501 = vmatpush1.msra.mxu0 0.0
        %502 = vmatprep.subr.mxu0 0.0
        %503 = vmatpush1.msra.mxu0 0.0
        %504 = vmatprep.subr.mxu0 0.0
        %505 = vmatpush1.msra.mxu0 0.0
        %506 = vmatprep.subr.mxu0 0.0
        %507 = vmatpush1.msra.mxu0 0.0
        %508 = vmatprep.subr.mxu0 0.0
        %509 = vmatpush1.msra.mxu0 0.0
        %510 = vmatprep.subr.mxu0 0.0
        %511 = vmatpush1.msra.mxu0 0.0
        %512 = vmatprep.subr.mxu0 0.0
        %513 = vmatpush1.msra.mxu0 0.0
        %514 = vmatprep.subr.mxu0 0.0
        %515 = vmatpush1.msra.mxu0 0.0
        %516 = vmatprep.subr.mxu0 0.0
        %517 = vmatpush1.msra.mxu0 0.0
        %518 = vmatprep.subr.mxu0 0.0
        %519 = vmatpush1.msra.mxu0 0.0
        %520 = vmatprep.subr.mxu0 0.0
        %521 = vmatpush1.msra.mxu0 0.0
        %522 = vmatprep.subr.mxu0 0.0
        %523 = vmatpush1.msra.mxu0 0.0
        %524 = vmatprep.subr.mxu0 0.0
        %525 = vmatpush1.msra.mxu0 0.0
        %526 = vmatprep.mubr.f32.mxu0 0.0
        %527 = vmatmul.mubr.f32.gmra.mrb[0].mxu0 %v380
        %v528 = vpop.f32.mrb[0].mxu0
        %v529 = vadd.f32 0.0, %v528
        %v530 = vpop.f32.mrb[0].mxu0
        %v531 = vadd.f32 0.0, %v530
        %532 = vdwg.mxu0
        %v533 = vld [vmem:[%s280] sm:$0xff]
        %v534 = vld [vmem:[%s280 + $0x8] sm:$0xff]
        %v539 = vcombine.low %v458, %v460
        %v540 = vcombine.low %v529, %v531
        %v543 = vadd.f32 %v533, %v539
        %v544 = vadd.f32 %v534, %v540
        %545 = vst [vmem:[%s323] sm:$0xff] %v543
        %546 = vst [vmem:[%s323 + $0x8] sm:$0xff] %v544
        %v547 = vlaneseq
        %v548 = vand.u32 %v547, 127
        %v549 = vadd.s32 %v548, 128
        %v550 = vadd.s32 %v548, 256
        %v551 = vadd.s32 %v548, 384
        %v552 = vlaneseq
        %v553 = vshrl.u32 %v552, 7
        %s554 = smul.u32 %s28, 512
        %v555 = vstv %s554
        %v556 = vadd.s32 %v555, %v548
        %v557 = vadd.s32 %v555, %v549
        %v558 = vadd.s32 %v555, %v550
        %v559 = vadd.s32 %v555, %v551
        %v560 = vmul.u32 %v553, 128
        %vm561 = vcmp.ge.s32.totalorder %v556, %v560
        %vm562 = vcmp.ge.s32.totalorder %v557, %v560
        %vm563 = vcmp.ge.s32.totalorder %v558, %v560
        %vm564 = vcmp.ge.s32.totalorder %v559, %v560
        %v565 = vadd.s32 %v560, 128
        %vm566 = vcmp.lt.s32.totalorder %v556, %v565
        %vm567 = vcmp.lt.s32.totalorder %v557, %v565
        %vm568 = vcmp.lt.s32.totalorder %v558, %v565
        %vm569 = vcmp.lt.s32.totalorder %v559, %v565
        %vm570 = vmand %vm561, %vm566
        %vm571 = vmand %vm562, %vm567
        %vm572 = vmand %vm563, %vm568
        %vm573 = vmand %vm564, %vm569
        %v574 = vsel %vm570, 1, 0
        %v575 = vsel %vm571, 1, 0
        %v576 = vsel %vm572, 1, 0
        %v577 = vsel %vm573, 1, 0
        %v578 = vcvt.s32.f32 %v574
        %v579 = vcvt.s32.f32 %v575
        %v580 = vcvt.s32.f32 %v576
        %v581 = vcvt.s32.f32 %v577
        %v582 = vld [vmem:[#allocation2] sm:$0xf]
        %vm583 = vcmask 64512
        %v585 = vsel %vm583, %v582, 0
        %587 = vmatprep.subr.mxu0 %v579
        %588 = vmatpush1.msra.mxu0 %v578
        %589 = vmatprep.subr.mxu0 0.0
        %590 = vmatpush1.msra.mxu0 0.0
        %591 = vmatprep.subr.mxu0 0.0
        %592 = vmatpush1.msra.mxu0 0.0
        %593 = vmatprep.subr.mxu0 0.0
        %594 = vmatpush1.msra.mxu0 0.0
        %595 = vmatprep.subr.mxu0 0.0
        %596 = vmatpush1.msra.mxu0 0.0
        %597 = vmatprep.subr.mxu0 0.0
        %598 = vmatpush1.msra.mxu0 0.0
        %599 = vmatprep.subr.mxu0 0.0
        %600 = vmatpush1.msra.mxu0 0.0
        %601 = vmatprep.subr.mxu0 0.0
        %602 = vmatpush1.msra.mxu0 0.0
        %603 = vmatprep.subr.mxu0 0.0
        %604 = vmatpush1.msra.mxu0 0.0
        %605 = vmatprep.subr.mxu0 0.0
        %606 = vmatpush1.msra.mxu0 0.0
        %607 = vmatprep.subr.mxu0 0.0
        %608 = vmatpush1.msra.mxu0 0.0
        %609 = vmatprep.subr.mxu0 0.0
        %610 = vmatpush1.msra.mxu0 0.0
        %611 = vmatprep.subr.mxu0 0.0
        %612 = vmatpush1.msra.mxu0 0.0
        %613 = vmatprep.subr.mxu0 0.0
        %614 = vmatpush1.msra.mxu0 0.0
        %615 = vmatprep.subr.mxu0 0.0
        %616 = vmatpush1.msra.mxu0 0.0
        %617 = vmatprep.subr.mxu0 0.0
        %618 = vmatpush1.msra.mxu0 0.0
        %619 = vmatprep.subr.mxu0 0.0
        %620 = vmatpush1.msra.mxu0 0.0
        %621 = vmatprep.subr.mxu0 0.0
        %622 = vmatpush1.msra.mxu0 0.0
        %623 = vmatprep.subr.mxu0 0.0
        %624 = vmatpush1.msra.mxu0 0.0
        %625 = vmatprep.subr.mxu0 0.0
        %626 = vmatpush1.msra.mxu0 0.0
        %627 = vmatprep.subr.mxu0 0.0
        %628 = vmatpush1.msra.mxu0 0.0
        %629 = vmatprep.subr.mxu0 0.0
        %630 = vmatpush1.msra.mxu0 0.0
        %631 = vmatprep.subr.mxu0 0.0
        %632 = vmatpush1.msra.mxu0 0.0
        %633 = vmatprep.subr.mxu0 0.0
        %634 = vmatpush1.msra.mxu0 0.0
        %635 = vmatprep.subr.mxu0 0.0
        %636 = vmatpush1.msra.mxu0 0.0
        %637 = vmatprep.subr.mxu0 0.0
        %638 = vmatpush1.msra.mxu0 0.0
        %639 = vmatprep.subr.mxu0 0.0
        %640 = vmatpush1.msra.mxu0 0.0
        %641 = vmatprep.subr.mxu0 0.0
        %642 = vmatpush1.msra.mxu0 0.0
        %643 = vmatprep.subr.mxu0 0.0
        %644 = vmatpush1.msra.mxu0 0.0
        %645 = vmatprep.subr.mxu0 0.0
        %646 = vmatpush1.msra.mxu0 0.0
        %647 = vmatprep.subr.mxu0 0.0
        %648 = vmatpush1.msra.mxu0 0.0
        %649 = vmatprep.subr.mxu0 0.0
        %650 = vmatpush1.msra.mxu0 0.0
        %651 = vmatprep.mubr.f32.mxu0 0.0
        %652 = vmatmul.mubr.f32.gmra.mrb[0].mxu0 %v585
        %v653 = vpop.f32.mrb[0].mxu0
        %v654 = vadd.f32 0.0, %v653
        %v655 = vpop.f32.mrb[0].mxu0
        %v656 = vadd.f32 0.0, %v655
        %657 = vdwg.mxu0
        %658 = vmatprep.subr.mxu0 %v581
        %659 = vmatpush1.msra.mxu0 %v580
        %660 = vmatprep.subr.mxu0 0.0
        %661 = vmatpush1.msra.mxu0 0.0
        %662 = vmatprep.subr.mxu0 0.0
        %663 = vmatpush1.msra.mxu0 0.0
        %664 = vmatprep.subr.mxu0 0.0
        %665 = vmatpush1.msra.mxu0 0.0
        %666 = vmatprep.subr.mxu0 0.0
        %667 = vmatpush1.msra.mxu0 0.0
        %668 = vmatprep.subr.mxu0 0.0
        %669 = vmatpush1.msra.mxu0 0.0
        %670 = vmatprep.subr.mxu0 0.0
        %671 = vmatpush1.msra.mxu0 0.0
        %672 = vmatprep.subr.mxu0 0.0
        %673 = vmatpush1.msra.mxu0 0.0
        %674 = vmatprep.subr.mxu0 0.0
        %675 = vmatpush1.msra.mxu0 0.0
        %676 = vmatprep.subr.mxu0 0.0
        %677 = vmatpush1.msra.mxu0 0.0
        %678 = vmatprep.subr.mxu0 0.0
        %679 = vmatpush1.msra.mxu0 0.0
        %680 = vmatprep.subr.mxu0 0.0
        %681 = vmatpush1.msra.mxu0 0.0
        %682 = vmatprep.subr.mxu0 0.0
        %683 = vmatpush1.msra.mxu0 0.0
        %684 = vmatprep.subr.mxu0 0.0
        %685 = vmatpush1.msra.mxu0 0.0
        %686 = vmatprep.subr.mxu0 0.0
        %687 = vmatpush1.msra.mxu0 0.0
        %688 = vmatprep.subr.mxu0 0.0
        %689 = vmatpush1.msra.mxu0 0.0
        %690 = vmatprep.subr.mxu0 0.0
        %691 = vmatpush1.msra.mxu0 0.0
        %692 = vmatprep.subr.mxu0 0.0
        %693 = vmatpush1.msra.mxu0 0.0
        %694 = vmatprep.subr.mxu0 0.0
        %695 = vmatpush1.msra.mxu0 0.0
        %696 = vmatprep.subr.mxu0 0.0
        %697 = vmatpush1.msra.mxu0 0.0
        %698 = vmatprep.subr.mxu0 0.0
        %699 = vmatpush1.msra.mxu0 0.0
        %700 = vmatprep.subr.mxu0 0.0
        %701 = vmatpush1.msra.mxu0 0.0
        %702 = vmatprep.subr.mxu0 0.0
        %703 = vmatpush1.msra.mxu0 0.0
        %704 = vmatprep.subr.mxu0 0.0
        %705 = vmatpush1.msra.mxu0 0.0
        %706 = vmatprep.subr.mxu0 0.0
        %707 = vmatpush1.msra.mxu0 0.0
        %708 = vmatprep.subr.mxu0 0.0
        %709 = vmatpush1.msra.mxu0 0.0
        %710 = vmatprep.subr.mxu0 0.0
        %711 = vmatpush1.msra.mxu0 0.0
        %712 = vmatprep.subr.mxu0 0.0
        %713 = vmatpush1.msra.mxu0 0.0
        %714 = vmatprep.subr.mxu0 0.0
        %715 = vmatpush1.msra.mxu0 0.0
        %716 = vmatprep.subr.mxu0 0.0
        %717 = vmatpush1.msra.mxu0 0.0
        %718 = vmatprep.subr.mxu0 0.0
        %719 = vmatpush1.msra.mxu0 0.0
        %720 = vmatprep.subr.mxu0 0.0
        %721 = vmatpush1.msra.mxu0 0.0
        %722 = vmatprep.mubr.f32.mxu0 0.0
        %723 = vmatmul.mubr.f32.gmra.mrb[0].mxu0 %v585
        %v724 = vpop.f32.mrb[0].mxu0
        %v725 = vadd.f32 0.0, %v724
        %v726 = vpop.f32.mrb[0].mxu0
        %v727 = vadd.f32 0.0, %v726
        %728 = vdwg.mxu0
        %vm729 = vcmp.gt.f32.partialorder %v654, 0.5
        %vm730 = vcmp.gt.f32.partialorder %v656, 0.5
        %vm731 = vcmp.gt.f32.partialorder %v725, 0.5
        %vm732 = vcmp.gt.f32.partialorder %v727, 0.5
        %v733 = vld [vmem:[%s334] sm:$0xff]
        %v734 = vld [vmem:[%s334 + $0x8] sm:$0xff]
        %v737 = vcombine.high %v733, %v733
        %v738 = vcombine.high %v734, %v734
        %v743 = vsel %vm729, %v733, %v339
        %v744 = vsel %vm730, %v737, %v376
        %v745 = vsel %vm731, %v734, %v340
        %v746 = vsel %vm732, %v738, %v377
        %v751 = vcombine.low %v743, %v744
        %v752 = vcombine.low %v745, %v746
        %755 = vst [vmem:[%s316] sm:$0xff] %v751
        %756 = vst [vmem:[%s316 + $0x8] sm:$0xff] %v752
        %s757 = sand.u32 %s156, 1
        %s758 = scalar_lea.sflag [#allocation4], %s757
        %s759 = sand.u32 %s156, 1
        %s760 = smul.addr %s759, 16
        %s761 = scalar_lea.vmem [#allocation7], %s760
        %s762 = sand.u32 %s182, 1
        %s763 = scalar_lea.sflag [#allocation9], %s762
        %s764 = sand.u32 %s182, 1
        %s765 = smul.addr %s764, 16
        %s766 = scalar_lea.vmem [#allocation8], %s765
        // Predicated region
        $region49: #{tpu_custom_call.1} parent=39 // pred_check
          %p767 = pneg %p166
        $region50: #{tpu_custom_call.1} parent=39 // pred_check_branch
          %769 = sbr.rel (%p767) target = $region52
        $region51: #{tpu_custom_call.1} parent=39 // pred_region
          %s770 = smul.u32 4, %s28
          %s772 = ssub.s32 256, 256
          %773 = vsyncadd %s758, %s772
          %s774 = smul.addr %s770, 64
          %s775 = scalar_lea.hbm %s5, %s774
          %s777 = sshll.u32 %s761, 4
          %s778 = int_to_ptr.vmem [resolvable:$true] %s777
          %780 = dma.vmem_to_hbm [thread:$0]  %s778, 256, %s775, %s758
        $region52: #{tpu_custom_call.1} parent=39 // pred_fallthru
          _
        // Predicated region
        $region53: #{tpu_custom_call.1} parent=39 // pred_check
          %p781 = pneg %p192
        $region54: #{tpu_custom_call.1} parent=39 // pred_check_branch
          %783 = sbr.rel (%p781) target = $region56
        $region55: #{tpu_custom_call.1} parent=39 // pred_region
          %s784 = smul.u32 4, %s28
          %s786 = ssub.s32 256, 256
          %787 = vsyncadd %s763, %s786
          %s788 = smul.addr %s784, 64
          %s789 = scalar_lea.hbm %s6, %s788
          %s791 = sshll.u32 %s766, 4
          %s792 = int_to_ptr.vmem [resolvable:$true] %s791
          %794 = dma.vmem_to_hbm [thread:$0]  %s792, 256, %s789, %s763
        $region56: #{tpu_custom_call.1} parent=39 // pred_fallthru
          _
      $region40: #{tpu_custom_call.1} parent=5 // pred_fallthru
        _
      %p795 = scmp.le.s32.totalorder 2, %s23
      // Predicated region
      $region57: #{tpu_custom_call.1} parent=5 // pred_check
        %p796 = pneg %p795
      $region58: #{tpu_custom_call.1} parent=5 // pred_check_branch
        %798 = sbr.rel (%p796) target = $region60
      $region59: #{tpu_custom_call.1} parent=5 // pred_region
        %s799 = ssub.s32 %s23, 2
        // Predicated region
        $region61: #{tpu_custom_call.1} parent=59 // pred_check
          %p800 = pneg %p172
        $region62: #{tpu_custom_call.1} parent=59 // pred_check_branch
          %802 = sbr.rel (%p800) target = $region64
        $region63: #{tpu_custom_call.1} parent=59 // pred_region
          %s803 = sand.u32 %s157, 1
          %s804 = scalar_lea.sflag [#allocation4], %s803
          %s805 = sand.u32 %s157, 1
          %s806 = smul.addr %s805, 16
          %s807 = scalar_lea.vmem [#allocation7], %s806
          %808 = dma.done %s804, 256
        $region64: #{tpu_custom_call.1} parent=59 // pred_fallthru
          _
        // Predicated region
        $region65: #{tpu_custom_call.1} parent=59 // pred_check
          %p809 = pneg %p198
        $region66: #{tpu_custom_call.1} parent=59 // pred_check_branch
          %811 = sbr.rel (%p809) target = $region68
        $region67: #{tpu_custom_call.1} parent=59 // pred_region
          %s812 = sand.u32 %s183, 1
          %s813 = scalar_lea.sflag [#allocation9], %s812
          %s814 = sand.u32 %s183, 1
          %s815 = smul.addr %s814, 16
          %s816 = scalar_lea.vmem [#allocation8], %s815
          %817 = dma.done %s813, 256
        $region68: #{tpu_custom_call.1} parent=59 // pred_fallthru
          _
      $region60: #{tpu_custom_call.1} parent=5 // pred_fallthru
        _
    $region6: #{tpu_custom_call.1} parent=1 // loop_footer
      %s27 = sadd.s32 1, %s23
    $region7: #{tpu_custom_call.1} parent=1 // loop_footer_branch
      %22 = sbr.rel target = $region3
    $region8: #{tpu_custom_call.1} parent=1 // loop_exit
      _
    %818 = vsyncpa [#allocation3], 1
    %s819 = scalar_lea.sflag [#allocation3], 1
    %820 = vsyncpa %s819, 1
    %821 = vsyncpa [#allocation6], 1
    %s822 = scalar_lea.sflag [#allocation6], 1
    %823 = vsyncpa %s822, 1
    %824 = vsyncpa [#allocation4], 1
    %s825 = scalar_lea.sflag [#allocation4], 1
    %826 = vsyncpa %s825, 1
    %827 = vsyncpa [#allocation9], 1
    %s828 = scalar_lea.sflag [#allocation9], 1
    %829 = vsyncpa %s828, 1

</llo_original>
